<compile_context>
chip_gen: v5e
topology: v5e:2x2
jax: 0.10.0
libtpu: 0.0.40
codegen_flags: <defaults>
</compile_context>

<pallas_src>
import functools
import math

import jax
import jax.numpy as jnp
from jax.experimental import pallas as pl
from jax.experimental.pallas import tpu as pltpu


CFG = dict(vocab=64, hidden=32, heads=2, layers=2, intermediate=64,
           max_pos=16, type_vocab=2, seq=8, batch=2)
LN_EPS = 1e-12


# ----------------------------------------------------------------------------
# Pallas kernels (all gridded over the tower axis, marked "parallel")
# ----------------------------------------------------------------------------
def _layernorm_kernel(x_ref, g_ref, b_ref, o_ref, *, eps):
    # LayerNorm math stays f32 (v5e has no bf16 VPU/EUP path).
    x = x_ref[...]
    mu = jnp.mean(x, axis=-1, keepdims=True)
    var = jnp.mean(jnp.square(x - mu), axis=-1, keepdims=True)
    y = (x - mu) * jax.lax.rsqrt(var + eps)
    o_ref[...] = (y * g_ref[...] + b_ref[...]).astype(o_ref.dtype)


def layernorm(x, gamma, beta, eps=LN_EPS):
    """x: (T, M, H); gamma/beta: (T, 1, H) -> (T, M, H)."""
    T, M, H = x.shape
    return pl.pallas_call(
        functools.partial(_layernorm_kernel, eps=eps),
        out_shape=jax.ShapeDtypeStruct((T, M, H), x.dtype),
        grid=(T,),
        in_specs=[
            pl.BlockSpec((None, M, H), lambda t: (t, 0, 0)),
            pl.BlockSpec((None, 1, H), lambda t: (t, 0, 0)),
            pl.BlockSpec((None, 1, H), lambda t: (t, 0, 0)),
        ],
        out_specs=pl.BlockSpec((None, M, H), lambda t: (t, 0, 0)),
        compiler_params=pltpu.CompilerParams(dimension_semantics=("parallel",)),
    )(x, gamma, beta)


def _linear_kernel(x_ref, w_ref, b_ref, o_ref, *, activation):
    # bf16 operands for the MXU, f32 accumulation + f32 epilogue.
    y = jnp.dot(x_ref[...].astype(jnp.bfloat16),
                w_ref[...].astype(jnp.bfloat16),
                preferred_element_type=jnp.float32)
    y = y + b_ref[...]
    if activation == "gelu":
        # TODO(synk): HF BERT uses exact erf-GELU; tanh approximation used here.
        y = jax.nn.gelu(y, approximate=True)
    elif activation == "tanh":
        y = jnp.tanh(y)
    o_ref[...] = y.astype(o_ref.dtype)


def linear(x, w, b, activation="none"):
    """Per-tower matmul+bias(+act): x (T,M,K), w (T,K,N), b (T,1,N) -> (T,M,N)."""
    T, M, K = x.shape
    N = w.shape[-1]
    # TODO(synk): at BERT-base sizes add an (M/tm, N/tn, K/tk) grid with
    # BlockSpec index_maps and an f32 VMEM accumulator; whole-operand blocks
    # are only appropriate at these toy shapes.
    return pl.pallas_call(
        functools.partial(_linear_kernel, activation=activation),
        out_shape=jax.ShapeDtypeStruct((T, M, N), x.dtype),
        grid=(T,),
        in_specs=[
            pl.BlockSpec((None, M, K), lambda t: (t, 0, 0)),
            pl.BlockSpec((None, K, N), lambda t: (t, 0, 0)),
            pl.BlockSpec((None, 1, N), lambda t: (t, 0, 0)),
        ],
        out_specs=pl.BlockSpec((None, M, N), lambda t: (t, 0, 0)),
        compiler_params=pltpu.CompilerParams(dimension_semantics=("parallel",)),
    )(x, w, b)


def _linear_add_ln_kernel(x_ref, w_ref, b_ref, r_ref, g_ref, be_ref, o_ref, *, eps):
    # Fused: matmul + bias + residual add + LayerNorm (f32 epilogue).
    y = jnp.dot(x_ref[...].astype(jnp.bfloat16),
                w_ref[...].astype(jnp.bfloat16),
                preferred_element_type=jnp.float32)
    y = y + b_ref[...] + r_ref[...]
    mu = jnp.mean(y, axis=-1, keepdims=True)
    var = jnp.mean(jnp.square(y - mu), axis=-1, keepdims=True)
    y = (y - mu) * jax.lax.rsqrt(var + eps)
    o_ref[...] = (y * g_ref[...] + be_ref[...]).astype(o_ref.dtype)


def linear_add_layernorm(x, w, b, residual, gamma, beta, eps=LN_EPS):
    """x (T,M,K) @ w (T,K,N) + b + residual (T,M,N), then LayerNorm."""
    T, M, K = x.shape
    N = w.shape[-1]
    return pl.pallas_call(
        functools.partial(_linear_add_ln_kernel, eps=eps),
        out_shape=jax.ShapeDtypeStruct((T, M, N), x.dtype),
        grid=(T,),
        in_specs=[
            pl.BlockSpec((None, M, K), lambda t: (t, 0, 0)),
            pl.BlockSpec((None, K, N), lambda t: (t, 0, 0)),
            pl.BlockSpec((None, 1, N), lambda t: (t, 0, 0)),
            pl.BlockSpec((None, M, N), lambda t: (t, 0, 0)),
            pl.BlockSpec((None, 1, N), lambda t: (t, 0, 0)),
            pl.BlockSpec((None, 1, N), lambda t: (t, 0, 0)),
        ],
        out_specs=pl.BlockSpec((None, M, N), lambda t: (t, 0, 0)),
        compiler_params=pltpu.CompilerParams(dimension_semantics=("parallel",)),
    )(x, w, b, residual, gamma, beta)


def _attention_kernel(q_ref, k_ref, v_ref, m_ref, o_ref, *, nh, dh, scale):
    # One (tower, batch) pair per grid point. q/k/v: (S, H); heads are folded
    # via static lane slices, so no split/merge transposes ever hit HBM.
    q = q_ref[...]
    k = k_ref[...]
    v = v_ref[...]
    bias = (1.0 - m_ref[...]) * -10000.0                      # (1, S) additive mask
    ctxs = []
    for h in range(nh):                                       # static unroll
        lo = h * dh
        qh = q[:, lo:lo + dh].astype(jnp.bfloat16)
        kh = k[:, lo:lo + dh].astype(jnp.bfloat16)
        vh = v[:, lo:lo + dh].astype(jnp.bfloat16)
        s = jax.lax.dot_general(qh, kh, (((1,), (1,)), ((), ())),
                                preferred_element_type=jnp.float32) * scale
        s = s + bias                                          # broadcast over rows
        mx = jnp.max(s, axis=-1, keepdims=True)
        p = jnp.exp(s - mx)
        p = p * pl.reciprocal(jnp.sum(p, axis=-1, keepdims=True), approx=True)
        ctxs.append(jnp.dot(p.astype(jnp.bfloat16), vh,
                            preferred_element_type=jnp.float32))
    o_ref[...] = jnp.concatenate(ctxs, axis=-1).astype(o_ref.dtype)


def attention(q, k, v, mask, nh, dh, scale):
    """q/k/v: (T, B, S, H); mask: (T, B, 1, S) float -> (T, B, S, H)."""
    T, B, S, H = q.shape
    spec_qkv = pl.BlockSpec((None, None, S, H), lambda t, b: (t, b, 0, 0))
    spec_m = pl.BlockSpec((None, None, 1, S), lambda t, b: (t, b, 0, 0))
    # TODO(synk): at real sequence lengths convert to flash-style online
    # softmax with a kv-tile grid axis instead of a full (S, S) score block.
    return pl.pallas_call(
        functools.partial(_attention_kernel, nh=nh, dh=dh, scale=scale),
        out_shape=jax.ShapeDtypeStruct((T, B, S, H), q.dtype),
        grid=(T, B),
        in_specs=[spec_qkv, spec_qkv, spec_qkv, spec_m],
        out_specs=spec_qkv,
        compiler_params=pltpu.CompilerParams(
            dimension_semantics=("parallel", "parallel")),
    )(q, k, v, mask)


# ----------------------------------------------------------------------------
# Deterministic parameter init (synthetic stand-in for pretrained weights)
# ----------------------------------------------------------------------------
def _init_bert_params(key, cfg):
    H, I = cfg["hidden"], cfg["intermediate"]
    std = 0.02
    keys = iter(jax.random.split(key, 8 + 12 * cfg["layers"]))

    def nrm(shape):
        return std * jax.random.normal(next(keys), shape, jnp.float32)

    p = {
        "word_emb": nrm((cfg["vocab"], H)),
        "pos_emb": nrm((cfg["max_pos"], H)),
        "type_emb": nrm((cfg["type_vocab"], H)),
        "emb_ln_g": jnp.ones((1, H), jnp.float32),
        "emb_ln_b": jnp.zeros((1, H), jnp.float32),
        "pool_w": nrm((H, H)),
        "pool_b": jnp.zeros((1, H), jnp.float32),
        "layers": [],
    }
    for _ in range(cfg["layers"]):
        lp = {
            # Q/K/V fused into one (H, 3H) projection.
            "qkv_w": jnp.concatenate([nrm((H, H)), nrm((H, H)), nrm((H, H))],
                                     axis=1),
            "qkv_b": jnp.zeros((1, 3 * H), jnp.float32),
            "o_w": nrm((H, H)), "o_b": jnp.zeros((1, H), jnp.float32),
            "ln1_g": jnp.ones((1, H), jnp.float32),
            "ln1_b": jnp.zeros((1, H), jnp.float32),
            "ff1_w": nrm((H, I)), "ff1_b": jnp.zeros((1, I), jnp.float32),
            "ff2_w": nrm((I, H)), "ff2_b": jnp.zeros((1, H), jnp.float32),
            "ln2_g": jnp.ones((1, H), jnp.float32),
            "ln2_b": jnp.zeros((1, H), jnp.float32),
        }
        p["layers"].append(lp)
    return p


def init_params(seed=0):
    cfg = CFG
    key = jax.random.PRNGKey(seed)
    k_text, k_know, k_cls = jax.random.split(key, 3)
    H = cfg["hidden"]
    text_p = _init_bert_params(k_text, cfg)
    know_p = _init_bert_params(k_know, cfg)
    # Stack the two towers along a leading axis of 2 so every pallas_call
    # runs both encoders at once (tower grid axis marked "parallel").
    towers = jax.tree_util.tree_map(lambda a, b: jnp.stack([a, b], axis=0),
                                    text_p, know_p)
    return {
        "towers": towers,
        "cls_w": 0.02 * jax.random.normal(k_cls, (2 * H, 2), jnp.float32),
        "cls_b": jnp.zeros((1, 2), jnp.float32),
    }


# ----------------------------------------------------------------------------
# Forward (glue around the Pallas kernels)
# ----------------------------------------------------------------------------
def bert_concat_forward(params, text_ids, text_mask, know_ids, know_mask,
                        labels=None):
    cfg = CFG
    B, S = text_ids.shape
    H, nh = cfg["hidden"], cfg["heads"]
    dh = H // nh
    T = 2
    tp = params["towers"]

    ids = jnp.stack([text_ids, know_ids], axis=0)              # (T, B, S)
    mask = jnp.stack([text_mask, know_mask], axis=0)           # (T, B, S)
    mask_f = mask.astype(jnp.float32).reshape(T, B, 1, S)      # bias made in-kernel

    # Embeddings: gathers in plain JAX (vmapped over towers); token_type = 0.
    def embed(we, pe, te, i):
        return we[i] + pe[None, :S, :] + te[0][None, None, :]

    x = jax.vmap(embed)(tp["word_emb"], tp["pos_emb"], tp["type_emb"], ids)
    x2 = x.reshape(T, B * S, H)
    x2 = layernorm(x2, tp["emb_ln_g"], tp["emb_ln_b"])         # no zeros residual

    scale = 1.0 / math.sqrt(dh)
    for lp in tp["layers"]:
        qkv = linear(x2, lp["qkv_w"], lp["qkv_b"])             # (T, M, 3H) fused
        q = qkv[:, :, :H].reshape(T, B, S, H)
        k = qkv[:, :, H:2 * H].reshape(T, B, S, H)
        v = qkv[:, :, 2 * H:].reshape(T, B, S, H)
        ctx = attention(q, k, v, mask_f, nh, dh, scale)        # (T, B, S, H)
        x2 = linear_add_layernorm(ctx.reshape(T, B * S, H),    # o_proj + LN1 fused
                                  lp["o_w"], lp["o_b"],
                                  x2, lp["ln1_g"], lp["ln1_b"])
        hmid = linear(x2, lp["ff1_w"], lp["ff1_b"], activation="gelu")
        x2 = linear_add_layernorm(hmid, lp["ff2_w"], lp["ff2_b"],  # ff2 + LN2 fused
                                  x2, lp["ln2_g"], lp["ln2_b"])

    seq = x2.reshape(T, B, S, H)
    cls_tok = seq[:, :, 0, :]                                  # (T, B, H)
    pooled = linear(cls_tok, tp["pool_w"], tp["pool_b"],
                    activation="tanh")                         # (T, B, H)

    res = jnp.concatenate([pooled[0], pooled[1]], axis=-1)     # (B, 2H)
    # Dropout(0.1) is identity at inference. Classifier output width (2) is
    # far below the 128-lane store width -> keep it in plain JAX.
    logits = res @ params["cls_w"] + params["cls_b"]           # (B, 2)
    if labels is not None:
        logp = jax.nn.log_softmax(logits, axis=-1)
        loss = -jnp.mean(jnp.take_along_axis(logp, labels[:, None], axis=1))
        return loss
    return logits


# ----------------------------------------------------------------------------
if __name__ == "__main__":
    key = jax.random.PRNGKey(0)
    k1, k2 = jax.random.split(key)
    B, S = CFG["batch"], CFG["seq"]

    text_ids = jax.random.randint(k1, (B, S), 0, CFG["vocab"], jnp.int32)
    know_ids = jax.random.randint(k2, (B, S), 0, CFG["vocab"], jnp.int32)
    text_mask = jnp.ones((B, S), jnp.int32).at[1, 6:].set(0)   # some padding
    know_mask = jnp.ones((B, S), jnp.int32).at[1, 5:].set(0)

    params = init_params(seed=0)
    logits = bert_concat_forward(params, text_ids, text_mask,
                                 know_ids, know_mask)
    jax.block_until_ready(logits)
    assert logits.shape == (B, 2) and logits.dtype == jnp.float32
    print("KERNEL_OK")
</pallas_src>

<mosaic_0001>
module attributes {stable_mosaic.version = 11 : i64} {
  func.func @_layernorm_kernel(%arg0: i32, %arg1: memref<1x16x32xf32, #tpu.memory_space<vmem>>, %arg2: memref<1x1x32xf32, #tpu.memory_space<vmem>>, %arg3: memref<1x1x32xf32, #tpu.memory_space<vmem>>, %arg4: memref<1x16x32xf32, #tpu.memory_space<vmem>>) attributes {dimension_semantics = [#tpu.dimension_semantics<parallel>], iteration_bounds = array<i64: 2>, scalar_prefetch = 0 : i64, scratch_operands = 0 : i64, tpu.core_type = #tpu.core_type<tc>, window_params = [{transform_indices = @transform_0, window_bounds = array<i64: 1, 16, 32>}, {transform_indices = @transform_1, window_bounds = array<i64: 1, 1, 32>}, {transform_indices = @transform_2, window_bounds = array<i64: 1, 1, 32>}, {transform_indices = @transform_3, window_bounds = array<i64: 1, 16, 32>}]} {
    %c0 = arith.constant 0 : index
    %c0_0 = arith.constant 0 : index
    %c0_1 = arith.constant 0 : index
    %0 = vector.load %arg1[%c0, %c0_0, %c0_1] : memref<1x16x32xf32, #tpu.memory_space<vmem>>, vector<1x16x32xf32>
    %1 = vector.shape_cast %0 : vector<1x16x32xf32> to vector<16x32xf32>
    %cst = arith.constant dense<0.000000e+00> : vector<16xf32>
    %2 = vector.multi_reduction <add>, %1, %cst [1] : vector<16x32xf32> to vector<16xf32>
    %3 = vector.shape_cast %2 : vector<16xf32> to vector<16x1xf32>
    %cst_2 = arith.constant 3.200000e+01 : f32
    %4 = vector.broadcast %cst_2 : f32 to vector<16x1xf32>
    %5 = arith.divf %3, %4 : vector<16x1xf32>
    %6 = vector.broadcast %5 : vector<16x1xf32> to vector<16x32xf32>
    %7 = arith.subf %1, %6 : vector<16x32xf32>
    %8 = arith.mulf %7, %7 : vector<16x32xf32>
    %cst_3 = arith.constant dense<0.000000e+00> : vector<16xf32>
    %9 = vector.multi_reduction <add>, %8, %cst_3 [1] : vector<16x32xf32> to vector<16xf32>
    %10 = vector.shape_cast %9 : vector<16xf32> to vector<16x1xf32>
    %cst_4 = arith.constant 3.200000e+01 : f32
    %11 = vector.broadcast %cst_4 : f32 to vector<16x1xf32>
    %12 = arith.divf %10, %11 : vector<16x1xf32>
    %13 = vector.broadcast %5 : vector<16x1xf32> to vector<16x32xf32>
    %14 = arith.subf %1, %13 : vector<16x32xf32>
    %cst_5 = arith.constant 9.99999996E-13 : f32
    %15 = vector.broadcast %cst_5 : f32 to vector<16x1xf32>
    %16 = arith.addf %12, %15 : vector<16x1xf32>
    %17 = math.rsqrt %16 : vector<16x1xf32>
    %18 = vector.broadcast %17 : vector<16x1xf32> to vector<16x32xf32>
    %19 = arith.mulf %14, %18 : vector<16x32xf32>
    %c0_6 = arith.constant 0 : index
    %c0_7 = arith.constant 0 : index
    %c0_8 = arith.constant 0 : index
    %20 = vector.load %arg2[%c0_6, %c0_7, %c0_8] : memref<1x1x32xf32, #tpu.memory_space<vmem>>, vector<1x1x32xf32>
    %21 = vector.shape_cast %20 : vector<1x1x32xf32> to vector<1x32xf32>
    %22 = vector.broadcast %21 : vector<1x32xf32> to vector<16x32xf32>
    %23 = arith.mulf %19, %22 : vector<16x32xf32>
    %c0_9 = arith.constant 0 : index
    %c0_10 = arith.constant 0 : index
    %c0_11 = arith.constant 0 : index
    %24 = vector.load %arg3[%c0_9, %c0_10, %c0_11] : memref<1x1x32xf32, #tpu.memory_space<vmem>>, vector<1x1x32xf32>
    %25 = vector.shape_cast %24 : vector<1x1x32xf32> to vector<1x32xf32>
    %26 = vector.broadcast %25 : vector<1x32xf32> to vector<16x32xf32>
    %27 = arith.addf %23, %26 : vector<16x32xf32>
    %c0_12 = arith.constant 0 : index
    %c0_13 = arith.constant 0 : index
    %c0_14 = arith.constant 0 : index
    %28 = vector.load %arg4[%c0_12, %c0_13, %c0_14] : memref<1x16x32xf32, #tpu.memory_space<vmem>>, vector<1x16x32xf32>
    %29 = vector.shape_cast %28 : vector<1x16x32xf32> to vector<16x32xf32>
    %30 = vector.shape_cast %27 : vector<16x32xf32> to vector<1x16x32xf32>
    tpu.vector_store %arg4[%c0_12, %c0_13, %c0_14], %30 {strides = array<i32>} : memref<1x16x32xf32, #tpu.memory_space<vmem>>, vector<1x16x32xf32>,
    return
  }
  func.func @transform_0(%arg0: i32) -> (i32, i32, i32) {
    %c0_i32 = arith.constant 0 : i32
    %c0_i32_0 = arith.constant 0 : i32
    %c0_i32_1 = arith.constant 0 : i32
    return %arg0, %c0_i32, %c0_i32_0 : i32, i32, i32
  }
  func.func @transform_1(%arg0: i32) -> (i32, i32, i32) {
    %c0_i32 = arith.constant 0 : i32
    %c0_i32_0 = arith.constant 0 : i32
    %c0_i32_1 = arith.constant 0 : i32
    return %arg0, %c0_i32, %c0_i32_0 : i32, i32, i32
  }
  func.func @transform_2(%arg0: i32) -> (i32, i32, i32) {
    %c0_i32 = arith.constant 0 : i32
    %c0_i32_0 = arith.constant 0 : i32
    %c0_i32_1 = arith.constant 0 : i32
    return %arg0, %c0_i32, %c0_i32_0 : i32, i32, i32
  }
  func.func @transform_3(%arg0: i32) -> (i32, i32, i32) {
    %c0_i32 = arith.constant 0 : i32
    %c0_i32_0 = arith.constant 0 : i32
    %c0_i32_1 = arith.constant 0 : i32
    return %arg0, %c0_i32, %c0_i32_0 : i32, i32, i32
  }
}

</mosaic_0001>

<llo_original>
// kernel: tpu_custom_call.1
$region0: #{tpu_custom_call.1}
  #allocation0 [shape = 'u32[]', space=smem, size = 0x4, offset = 0x4, fixed_abs, tag = 'smem constant byte address 0x4 - core index']
  #allocation1 [shape = 'u32[72,128]{1,0:T(1,128)}', space=vmem, size = 0x9000, scoped, tag = 'internal scratch']
  %s0 = inlined_call_operand.hbm [shape: f32[2,16,32], index: 0, kind: input, shape index: {}]
  %s1 = inlined_call_operand.hbm [shape: f32[2,1,32], index: 1, kind: input, shape index: {}]
  %s2 = inlined_call_operand.hbm [shape: f32[2,1,32], index: 2, kind: input, shape index: {}]
  %s3 = inlined_call_operand.hbm [shape: f32[2,16,32], index: 3, kind: output, shape index: {}]
  %s4 = sld [smem:[#allocation0]]
  $region57: #{tpu_custom_call.1} parent=0
    _
  %s6 = ssub.s32 1, %s4
  %s7 = scalar_select 0, %s6, %s4
  $region1: #{tpu_custom_call.1} parent=0
    #allocation2 [shape = 'u8[16384]{0}', space=vmem, size = 0x4000, scoped, tag = 'input window, operand 0']
    #allocation3 [shape = 's32[2]{0}', space=sflag, size = 0x8, scoped, tag = 'scoped memory for tpu_custom_call.1']
    #allocation4 [shape = 's32[2]{0}', space=sflag, size = 0x8, scoped, tag = 'scoped memory for tpu_custom_call.1']
    #allocation5 [shape = 'u8[1024]{0}', space=vmem, size = 0x400, scoped, tag = 'input window, operand 1']
    #allocation6 [shape = 's32[2]{0}', space=sflag, size = 0x8, scoped, tag = 'scoped memory for tpu_custom_call.1']
    #allocation7 [shape = 'u8[1024]{0}', space=vmem, size = 0x400, scoped, tag = 'input window, operand 2']
    #allocation8 [shape = 'u8[16384]{0}', space=vmem, size = 0x4000, scoped, tag = 'output window, operand 0']
    %8 = vsyncpa [#allocation3], 0
    %s9 = scalar_lea.sflag [#allocation3], 1
    %10 = vsyncpa %s9, 0
    %11 = vsyncpa [#allocation6], 0
    %s12 = scalar_lea.sflag [#allocation6], 1
    %13 = vsyncpa %s12, 0
    %14 = vsyncpa [#allocation4], 0
    %s15 = scalar_lea.sflag [#allocation4], 1
    %16 = vsyncpa %s15, 0
    loop: start=0, step=1, limit=4
    $region2: #{tpu_custom_call.1} parent=1 // loop_pre_header
      _
    $region3: #{tpu_custom_call.1} parent=1 // loop_header
      %s18 = sphi 0, %s22
      %p19 = scmp.ge.s32.totalorder %s18, 4
      %s28 = sphi 0, %s30
      %s31 = sphi 0, %s28
      %s32 = sphi 0, %s31
      %s48 = sphi 0, %s32
      %s54 = sphi 0, %s56
      %s57 = sphi 0, %s54
      %s58 = sphi 0, %s57
      %s74 = sphi 0, %s58
      %s80 = sphi 0, %s82
      %s83 = sphi 0, %s80
      %s84 = sphi 0, %s83
      %s100 = sphi 0, %s84
      %s106 = sphi 0, %s108
      %s109 = sphi 0, %s106
      %s110 = sphi 0, %s109
      %s126 = sphi 0, %s110
    $region4: #{tpu_custom_call.1} parent=1 // loop_header_branch
      %21 = sbr.rel (%p19) target = $region8
    $region5: #{tpu_custom_call.1} parent=1 // loop_body
      %s23 = ssub.s32 %s18, 1
      %s24 = ssub.s32 %s18, 2
      %s25 = sadd.s32 %s18, 1
      %s26 = ssub.s32 %s18, %s25
      %p27 = scmp.eq.s32.totalorder %s26, 0
      %s29 = sadd.s32 %s28, 1
      %s30 = scalar_select %p27, %s28, %s29
      %p33 = pneg %p27
      %p34 = scmp.eq.s32.totalorder %s18, 1
      %p35 = por %p33, %p34
      %p36 = scmp.ne.s32.totalorder %s28, %s31
      %p37 = scmp.eq.s32.totalorder %s18, 0
      %p38 = por %p36, %p37
      %p39 = scmp.ne.s32.totalorder %s28, %s31
      %p40 = scmp.eq.s32.totalorder %s23, 1
      %p41 = por %p39, %p40
      %p42 = scmp.ne.s32.totalorder %s31, %s32
      %p43 = scmp.eq.s32.totalorder %s23, 0
      %p44 = por %p42, %p43
      %p45 = scmp.ne.s32.totalorder %s31, %s32
      %p46 = scmp.eq.s32.totalorder %s24, 1
      %p47 = por %p45, %p46
      %p49 = scmp.ne.s32.totalorder %s32, %s48
      %p50 = scmp.eq.s32.totalorder %s24, 0
      %p51 = por %p49, %p50
      %s52 = ssub.s32 %s18, %s25
      %p53 = scmp.eq.s32.totalorder %s52, 0
      %s55 = sadd.s32 %s54, 1
      %s56 = scalar_select %p53, %s54, %s55
      %p59 = pneg %p53
      %p60 = scmp.eq.s32.totalorder %s18, 1
      %p61 = por %p59, %p60
      %p62 = scmp.ne.s32.totalorder %s54, %s57
      %p63 = scmp.eq.s32.totalorder %s18, 0
      %p64 = por %p62, %p63
      %p65 = scmp.ne.s32.totalorder %s54, %s57
      %p66 = scmp.eq.s32.totalorder %s23, 1
      %p67 = por %p65, %p66
      %p68 = scmp.ne.s32.totalorder %s57, %s58
      %p69 = scmp.eq.s32.totalorder %s23, 0
      %p70 = por %p68, %p69
      %p71 = scmp.ne.s32.totalorder %s57, %s58
      %p72 = scmp.eq.s32.totalorder %s24, 1
      %p73 = por %p71, %p72
      %p75 = scmp.ne.s32.totalorder %s58, %s74
      %p76 = scmp.eq.s32.totalorder %s24, 0
      %p77 = por %p75, %p76
      %s78 = ssub.s32 %s18, %s25
      %p79 = scmp.eq.s32.totalorder %s78, 0
      %s81 = sadd.s32 %s80, 1
      %s82 = scalar_select %p79, %s80, %s81
      %p85 = pneg %p79
      %p86 = scmp.eq.s32.totalorder %s18, 1
      %p87 = por %p85, %p86
      %p88 = scmp.ne.s32.totalorder %s80, %s83
      %p89 = scmp.eq.s32.totalorder %s18, 0
      %p90 = por %p88, %p89
      %p91 = scmp.ne.s32.totalorder %s80, %s83
      %p92 = scmp.eq.s32.totalorder %s23, 1
      %p93 = por %p91, %p92
      %p94 = scmp.ne.s32.totalorder %s83, %s84
      %p95 = scmp.eq.s32.totalorder %s23, 0
      %p96 = por %p94, %p95
      %p97 = scmp.ne.s32.totalorder %s83, %s84
      %p98 = scmp.eq.s32.totalorder %s24, 1
      %p99 = por %p97, %p98
      %p101 = scmp.ne.s32.totalorder %s84, %s100
      %p102 = scmp.eq.s32.totalorder %s24, 0
      %p103 = por %p101, %p102
      %s104 = ssub.s32 %s18, %s25
      %p105 = scmp.eq.s32.totalorder %s104, 0
      %s107 = sadd.s32 %s106, 1
      %s108 = scalar_select %p105, %s106, %s107
      %p111 = pneg %p105
      %p112 = scmp.eq.s32.totalorder %s18, 1
      %p113 = por %p111, %p112
      %p114 = scmp.ne.s32.totalorder %s106, %s109
      %p115 = scmp.eq.s32.totalorder %s18, 0
      %p116 = por %p114, %p115
      %p117 = scmp.ne.s32.totalorder %s106, %s109
      %p118 = scmp.eq.s32.totalorder %s23, 1
      %p119 = por %p117, %p118
      %p120 = scmp.ne.s32.totalorder %s109, %s110
      %p121 = scmp.eq.s32.totalorder %s23, 0
      %p122 = por %p120, %p121
      %p123 = scmp.ne.s32.totalorder %s109, %s110
      %p124 = scmp.eq.s32.totalorder %s24, 1
      %p125 = por %p123, %p124
      %p127 = scmp.ne.s32.totalorder %s110, %s126
      %p128 = scmp.eq.s32.totalorder %s24, 0
      %p129 = por %p127, %p128
      %p130 = scmp.le.s32.totalorder 1, %s18
      %p131 = scmp.lt.s32.totalorder %s18, 3
      %p132 = pnand %p130, %p131
      %p133 = pneg %p132
      // Predicated region
      $region9: #{tpu_custom_call.1} parent=5 // pred_check
        _
      $region10: #{tpu_custom_call.1} parent=5 // pred_check_branch
        %135 = sbr.rel (%p132) target = $region12
      $region11: #{tpu_custom_call.1} parent=5 // pred_region
        %s136 = ssub.s32 %s18, 1
      $region12: #{tpu_custom_call.1} parent=5 // pred_fallthru
        _
      %p137 = scmp.lt.s32.totalorder %s18, 2
      // Predicated region
      $region13: #{tpu_custom_call.1} parent=5 // pred_check
        %p138 = pneg %p137
      $region14: #{tpu_custom_call.1} parent=5 // pred_check_branch
        %140 = sbr.rel (%p138) target = $region16
      $region15: #{tpu_custom_call.1} parent=5 // pred_region
        // Predicated region
        $region17: #{tpu_custom_call.1} parent=15 // pred_check
          %p141 = pneg %p38
        $region18: #{tpu_custom_call.1} parent=15 // pred_check_branch
          %143 = sbr.rel (%p141) target = $region20
        $region19: #{tpu_custom_call.1} parent=15 // pred_region
          %s144 = sand.u32 %s28, 1
          %s145 = scalar_lea.sflag [#allocation3], %s144
          %s146 = sand.u32 %s28, 1
          %s147 = smul.addr %s146, 16
          %s148 = scalar_lea.vmem [#allocation2], %s147
          %150 = vsyncadd %s145, 0
          %s151 = smul.addr %s18, 2
          %s152 = smul.addr %s151, 8
          %s153 = scalar_lea.hbm %s0, %s152
          %s154 = sshll.u32 %s153, 4
          %s155 = int_to_ptr.hbm [resolvable:$true] %s154
          %s156 = sshll.u32 %s148, 4
          %s157 = int_to_ptr.vmem [resolvable:$true] %s156
          %162 = dma.hbm_to_vmem [thread:$0]  %s155, 256, %s157, %s145, 128, 128, 8
        $region20: #{tpu_custom_call.1} parent=15 // pred_fallthru
          _
        // Predicated region
        $region21: #{tpu_custom_call.1} parent=15 // pred_check
          %p163 = pneg %p64
        $region22: #{tpu_custom_call.1} parent=15 // pred_check_branch
          %165 = sbr.rel (%p163) target = $region24
        $region23: #{tpu_custom_call.1} parent=15 // pred_region
          %s166 = sand.u32 %s18, 1
          %s167 = scalar_lea.sflag [#allocation6], %s166
          %s168 = sand.u32 %s54, 1
          %s169 = scalar_lea.vmem [#allocation5], %s168
          %171 = vsyncadd %s167, 0
          %s172 = scalar_lea.hbm %s1, %s18
          %s174 = sshll.u32 %s172, 4
          %s175 = int_to_ptr.hbm [resolvable:$true] %s174
          %s176 = sshll.u32 %s169, 4
          %s177 = int_to_ptr.vmem [resolvable:$true] %s176
          %179 = dma.hbm_to_vmem [thread:$0]  %s175, 16, %s177, %s167
        $region24: #{tpu_custom_call.1} parent=15 // pred_fallthru
          _
        // Predicated region
        $region25: #{tpu_custom_call.1} parent=15 // pred_check
          %p180 = pneg %p90
        $region26: #{tpu_custom_call.1} parent=15 // pred_check_branch
          %182 = sbr.rel (%p180) target = $region28
        $region27: #{tpu_custom_call.1} parent=15 // pred_region
          %s183 = sand.u32 %s18, 1
          %s184 = scalar_lea.sflag [#allocation6], %s183
          %s185 = sand.u32 %s80, 1
          %s186 = scalar_lea.vmem [#allocation7], %s185
          %188 = vsyncadd %s184, 0
          %s189 = scalar_lea.hbm %s2, %s18
          %s191 = sshll.u32 %s189, 4
          %s192 = int_to_ptr.hbm [resolvable:$true] %s191
          %s193 = sshll.u32 %s186, 4
          %s194 = int_to_ptr.vmem [resolvable:$true] %s193
          %196 = dma.hbm_to_vmem [thread:$0]  %s192, 16, %s194, %s184
        $region28: #{tpu_custom_call.1} parent=15 // pred_fallthru
          _
      $region16: #{tpu_custom_call.1} parent=5 // pred_fallthru
        _
      %p197 = scmp.le.s32.totalorder 1, %s18
      %p198 = scmp.lt.s32.totalorder %s18, 3
      %p199 = pnand %p197, %p198
      %p200 = pneg %p199
      // Predicated region
      $region29: #{tpu_custom_call.1} parent=5 // pred_check
        _
      $region30: #{tpu_custom_call.1} parent=5 // pred_check_branch
        %202 = sbr.rel (%p199) target = $region32
      $region31: #{tpu_custom_call.1} parent=5 // pred_region
        %s203 = ssub.s32 %s18, 1
        %s204 = sand.u32 %s31, 1
        %s205 = scalar_lea.sflag [#allocation3], %s204
        %s206 = sand.u32 %s31, 1
        %s207 = smul.addr %s206, 16
        %s208 = scalar_lea.vmem [#allocation2], %s207
        // Predicated region
        $region33: #{tpu_custom_call.1} parent=31 // pred_check
          %p209 = pneg %p44
        $region34: #{tpu_custom_call.1} parent=31 // pred_check_branch
          %211 = sbr.rel (%p209) target = $region36
        $region35: #{tpu_custom_call.1} parent=31 // pred_region
          %213 = dma.done %s205, 256
        $region36: #{tpu_custom_call.1} parent=31 // pred_fallthru
          _
        %s214 = sand.u32 %s23, 1
        %s215 = scalar_lea.sflag [#allocation6], %s214
        %s216 = sand.u32 %s57, 1
        %s217 = scalar_lea.vmem [#allocation5], %s216
        // Predicated region
        $region37: #{tpu_custom_call.1} parent=31 // pred_check
          %p218 = pneg %p70
        $region38: #{tpu_custom_call.1} parent=31 // pred_check_branch
          %220 = sbr.rel (%p218) target = $region40
        $region39: #{tpu_custom_call.1} parent=31 // pred_region
          %222 = dma.done %s215, 16
        $region40: #{tpu_custom_call.1} parent=31 // pred_fallthru
          _
        %s223 = sand.u32 %s23, 1
        %s224 = scalar_lea.sflag [#allocation6], %s223
        %s225 = sand.u32 %s83, 1
        %s226 = scalar_lea.vmem [#allocation7], %s225
        // Predicated region
        $region41: #{tpu_custom_call.1} parent=31 // pred_check
          %p227 = pneg %p96
        $region42: #{tpu_custom_call.1} parent=31 // pred_check_branch
          %229 = sbr.rel (%p227) target = $region44
        $region43: #{tpu_custom_call.1} parent=31 // pred_region
          %231 = dma.done %s224, 16
        $region44: #{tpu_custom_call.1} parent=31 // pred_fallthru
          _
        %s232 = sand.u32 %s31, 1
        %s233 = scalar_lea.sflag [#allocation3], %s232
        %s234 = sand.u32 %s31, 1
        %s235 = smul.addr %s234, 16
        %s236 = scalar_lea.vmem [#allocation2], %s235
        %p237 = pneg %p44
        %p238 = pneg %p41
        %s239 = sand.u32 %s23, 1
        %s240 = scalar_lea.sflag [#allocation6], %s239
        %s241 = sand.u32 %s57, 1
        %s242 = scalar_lea.vmem [#allocation5], %s241
        %p243 = pneg %p70
        %p244 = pneg %p67
        %s245 = sand.u32 %s23, 1
        %s246 = scalar_lea.sflag [#allocation6], %s245
        %s247 = sand.u32 %s83, 1
        %s248 = scalar_lea.vmem [#allocation7], %s247
        %p249 = pneg %p96
        %p250 = pneg %p93
        %p251 = pneg %p122
        %p252 = pneg %p119
        %s253 = sand.u32 %s109, 1
        %s254 = scalar_lea.sflag [#allocation4], %s253
        %s255 = sand.u32 %s109, 1
        %s256 = smul.addr %s255, 16
        %s257 = scalar_lea.vmem [#allocation8], %s256
        %v258 = vld [vmem:[%s208] sm:$0xff]
        %v259 = vld [vmem:[%s208 + $0x8] sm:$0xff]
        %vm260 = vcmask 261120
        %v261 = vsel %vm260, %v258, 0.0
        %262 = vadd.xlane.f32.xlu0 %v261
        %v263 = vpop.xlane.xlu0 %262
        %v264 = vsel %vm260, %v259, 0.0
        %265 = vadd.xlane.f32.xlu0 %v264
        %v266 = vpop.xlane.xlu0 %265
        %v267 = vrcp.pop 32.0
        %v268 = vmul.f32 32.0, %v267
        %v269 = vsub.f32 1.0, %v268
        %v270 = vmul.f32 %v267, %v269
        %v271 = vadd.f32 %v267, %v270
        %vm272 = vweird.f32 %v267
        %v273 = vsel %vm272, %v267, %v271
        %v274 = vmul.f32 %v263, %v273
        %v275 = vmul.f32 %v266, %v273
        %v276 = vsub.f32 %v258, %v274
        %v277 = vsub.f32 %v259, %v275
        %v278 = vmul.f32 %v276, %v276
        %v279 = vmul.f32 %v277, %v277
        %v280 = vsel %vm260, %v278, 0.0
        %281 = vadd.xlane.f32.xlu0 %v280
        %v282 = vpop.xlane.xlu0 %281
        %v283 = vsel %vm260, %v279, 0.0
        %284 = vadd.xlane.f32.xlu0 %v283
        %v285 = vpop.xlane.xlu0 %284
        %v286 = vmul.f32 %v282, %v273
        %v287 = vmul.f32 %v285, %v273
        %v288 = vadd.f32 %v286, 1e-12
        %v289 = vadd.f32 %v287, 1e-12
        %v290 = vrsqrt.pop %v288
        %v291 = vmul.f32 %v290, %v288
        %v292 = vmul.f32 %v291, %v290
        %v293 = vmul.f32 0.5, %v292
        %v294 = vsub.f32 1.5, %v293
        %v295 = vmul.f32 %v290, %v294
        %vm296 = vweird.f32 %v288
        %vm297 = vweird.f32 %v290
        %vm298 = vmor %vm296, %vm297
        %v299 = vsel %vm298, %v290, %v295
        %v300 = vrsqrt.pop %v289
        %v301 = vmul.f32 %v300, %v289
        %v302 = vmul.f32 %v301, %v300
        %v303 = vmul.f32 0.5, %v302
        %v304 = vsub.f32 1.5, %v303
        %v305 = vmul.f32 %v300, %v304
        %vm306 = vweird.f32 %v289
        %vm307 = vweird.f32 %v300
        %vm308 = vmor %vm306, %vm307
        %v309 = vsel %vm308, %v300, %v305
        %v310 = vmul.f32 %v276, %v299
        %v311 = vmul.f32 %v277, %v309
        %v312 = vld [vmem:[%s217] sm:$0x1]
        %v314 = vperm.slane %v312, 0
        %v316 = vmul.f32 %v310, %v314
        %v317 = vmul.f32 %v311, %v314
        %v318 = vld [vmem:[%s226] sm:$0x1]
        %v320 = vperm.slane %v318, 0
        %v322 = vadd.f32 %v316, %v320
        %v323 = vadd.f32 %v317, %v320
        %324 = vst.msk [vmem:[%s257] sm:$0xff] %vm260, %v322
        %325 = vst.msk [vmem:[%s257 + $0x8] sm:$0xff] %vm260, %v323
        %s326 = sand.u32 %s109, 1
        %s327 = scalar_lea.sflag [#allocation4], %s326
        %s328 = sand.u32 %s109, 1
        %s329 = smul.addr %s328, 16
        %s330 = scalar_lea.vmem [#allocation8], %s329
        // Predicated region
        $region45: #{tpu_custom_call.1} parent=31 // pred_check
          %p331 = pneg %p119
        $region46: #{tpu_custom_call.1} parent=31 // pred_check_branch
          %333 = sbr.rel (%p331) target = $region48
        $region47: #{tpu_custom_call.1} parent=31 // pred_region
          %335 = vsyncadd %s327, 0
          %s336 = smul.addr %s23, 2
          %s337 = smul.addr %s336, 8
          %s338 = scalar_lea.hbm %s3, %s337
          %s339 = sshll.u32 %s330, 4
          %s340 = int_to_ptr.vmem [resolvable:$true] %s339
          %s341 = sshll.u32 %s338, 4
          %s342 = int_to_ptr.hbm [resolvable:$true] %s341
          %347 = dma.vmem_to_hbm [thread:$0]  %s340, 256, %s342, %s327, 128, 128, 8
        $region48: #{tpu_custom_call.1} parent=31 // pred_fallthru
          _
      $region32: #{tpu_custom_call.1} parent=5 // pred_fallthru
        _
      %p348 = scmp.le.s32.totalorder 2, %s18
      // Predicated region
      $region49: #{tpu_custom_call.1} parent=5 // pred_check
        %p349 = pneg %p348
      $region50: #{tpu_custom_call.1} parent=5 // pred_check_branch
        %351 = sbr.rel (%p349) target = $region52
      $region51: #{tpu_custom_call.1} parent=5 // pred_region
        %s352 = ssub.s32 %s18, 2
        // Predicated region
        $region53: #{tpu_custom_call.1} parent=51 // pred_check
          %p353 = pneg %p125
        $region54: #{tpu_custom_call.1} parent=51 // pred_check_branch
          %355 = sbr.rel (%p353) target = $region56
        $region55: #{tpu_custom_call.1} parent=51 // pred_region
          %s356 = sand.u32 %s110, 1
          %s357 = scalar_lea.sflag [#allocation4], %s356
          %s358 = sand.u32 %s110, 1
          %s359 = smul.addr %s358, 16
          %s360 = scalar_lea.vmem [#allocation8], %s359
          %362 = dma.done %s357, 256
        $region56: #{tpu_custom_call.1} parent=51 // pred_fallthru
          _
      $region52: #{tpu_custom_call.1} parent=5 // pred_fallthru
        _
    $region6: #{tpu_custom_call.1} parent=1 // loop_footer
      %s22 = sadd.s32 1, %s18
    $region7: #{tpu_custom_call.1} parent=1 // loop_footer_branch
      %17 = sbr.rel target = $region3
    $region8: #{tpu_custom_call.1} parent=1 // loop_exit
      _
    %363 = vsyncpa [#allocation3], 1
    %s364 = scalar_lea.sflag [#allocation3], 1
    %365 = vsyncpa %s364, 1
    %366 = vsyncpa [#allocation6], 1
    %s367 = scalar_lea.sflag [#allocation6], 1
    %368 = vsyncpa %s367, 1
    %369 = vsyncpa [#allocation4], 1
    %s370 = scalar_lea.sflag [#allocation4], 1
    %371 = vsyncpa %s370, 1

</llo_original>
